<compile_context>
chip_gen: v5e
topology: v5e:2x2
jax: 0.10.0
libtpu: 0.0.40
codegen_flags: <defaults>
</compile_context>

<pallas_src>
import math

import jax
import jax.numpy as jnp
from jax.experimental import pallas as pl
from jax.experimental.pallas import tpu as pltpu


_NEG_MASK = -1.0e30  # finite "-inf" for padded vocab columns (no NaN risk)


def _round_up(v, m):
    return (v + m - 1) // m * m


def _vmem_budget_bytes():
    """~80% of per-TensorCore VMEM (leaves headroom for Mosaic internal scratch).

    Note: with a "parallel" row axis each TC holds its own copy of any resident
    weight, so budgeting against *per-TC* capacity is the right thing on v7x.
    """
    cap = 64 << 20  # conservative default = v7x per-TC VMEM
    try:
        cap = int(getattr(pltpu.get_tpu_info(), "vmem_capacity_bytes", cap))
    except Exception:
        pass
    return max(16 << 20, int(cap * 0.8))


def _to_mxu_dtype(x):
    # MXU is bf16-native on v5e/v6e/v7x; accumulate in f32.  (Best case the
    # caller already supplies bf16 activations and this is a no-op.)
    return x if x.dtype == jnp.bfloat16 else x.astype(jnp.bfloat16)


# ---------------------------------------------------------------------------
# Kernels
# ---------------------------------------------------------------------------


def _proj_fused_kernel(x_ref, w_ref, b_ref, o_ref):
    """Weight-resident path: one row tile, full (padded) vocab per step."""
    x = _to_mxu_dtype(x_ref[...])                                   # (tn, E)
    logits = jnp.dot(x, w_ref[...], preferred_element_type=jnp.float32)
    logits = logits + b_ref[...]                                    # (tn, Vp) f32

    # Numerically stable log-softmax over the vocab (lane) axis.
    m = jnp.max(logits, axis=-1, keepdims=True)
    shifted = logits - m
    lse = jnp.log(jnp.sum(jnp.exp(shifted), axis=-1, keepdims=True))
    o_ref[...] = (shifted - lse).astype(o_ref.dtype)


def _proj_tiled_kernel(x_ref, w_ref, b_ref, o_ref, m_ref, l_ref):
    """Vocab-tiled path.  Grid = (n_tiles, 2 phases, v_tiles).

    phase 0: online max / sum-exp accumulation over the vocab tiles.
    phase 1: recompute the logits tile and emit logits - (m + log(l)).
    (Recompute keeps HBM traffic minimal; a stored-logits second pass would
    trade 2x MXU work for an extra [N,V] HBM round trip.)
    """
    p = pl.program_id(1)
    v = pl.program_id(2)

    @pl.when(jnp.logical_and(p == 0, v == 0))
    def _init():
        m_ref[...] = jnp.full(m_ref.shape, -jnp.inf, jnp.float32)
        l_ref[...] = jnp.zeros(l_ref.shape, jnp.float32)

    x = _to_mxu_dtype(x_ref[...])                                   # (tn, E)
    logits = jnp.dot(x, w_ref[...], preferred_element_type=jnp.float32)
    logits = logits + b_ref[...]                                    # (tn, tv) f32

    @pl.when(p == 0)
    def _accumulate():
        m_prev = m_ref[...]
        m_new = jnp.maximum(m_prev, jnp.max(logits, axis=-1, keepdims=True))
        l_ref[...] = (l_ref[...] * jnp.exp(m_prev - m_new)
                      + jnp.sum(jnp.exp(logits - m_new), axis=-1, keepdims=True))
        m_ref[...] = m_new

    @pl.when(p == 1)
    def _emit():
        lse = m_ref[...] + jnp.log(l_ref[...])
        o_ref[...] = (logits - lse).astype(o_ref.dtype)


# ---------------------------------------------------------------------------
# Tile planning
# ---------------------------------------------------------------------------


def _fused_plan(n, e, vp, x_bytes, o_bytes, budget):
    """Largest row tile for which the weight-resident path fits the budget."""
    w_bytes = e * vp * 2                 # bf16 weight, single-buffered
    b_bytes = vp * 4
    for tn in (512, 256, 128, 64, 32, 16, 8):
        tn = min(tn, _round_up(n, 8))
        per_tile = (2 * tn * e * x_bytes     # x tile, double-buffered
                    + 2 * tn * vp * o_bytes  # out tile, double-buffered
                    + 3 * tn * vp * 4)       # f32 logits / shifted / exp
        if w_bytes + b_bytes + per_tile <= budget:
            return tn
    return None


def _tiled_plan(n, e, v, x_bytes, o_bytes, budget, max_tile_v):
    """Pick (tile_n, tile_v, padded V) for the vocab-tiled path."""
    vp128 = _round_up(v, 128)
    for tn in (256, 128, 64, 32, 16, 8):
        tn = min(tn, _round_up(n, 8))
        for tv in (2048, 1024, 512, 256, 128):
            if tv > max_tile_v or tv > max(vp128, 128):
                continue
            need = (2 * tn * e * x_bytes     # x tile (double-buffered)
                    + 2 * e * tv * 2         # streamed weight tile (bf16, 2-deep)
                    + 2 * tv * 4             # streamed bias tile
                    + 2 * tn * tv * o_bytes  # out tile
                    + 3 * tn * tv * 4        # f32 intermediates
                    + 2 * tn * 4 * 2)        # m / l scratch
            if need <= budget:
                return tn, tv, _round_up(v, tv)
    return min(8, _round_up(n, 8)), 128, _round_up(v, 128)


# ---------------------------------------------------------------------------
# Wrapper
# ---------------------------------------------------------------------------


def projection_layer(x, w, b, *, out_dtype=None, force_vocab_tiling=False,
                     max_tile_v=2048):
    """x: [..., E]; w: [E, V] (transposed torch Linear weight); b: [V].

    out_dtype: dtype of the emitted log-probs (default: x.dtype).  Pass
    jnp.bfloat16 to halve the dominant [N, V] HBM writeback when memory-bound.
    """
    orig_shape = x.shape
    E = orig_shape[-1]
    V = w.shape[1]
    N = math.prod(orig_shape[:-1])
    out_dtype = out_dtype if out_dtype is not None else x.dtype

    x_bytes = jnp.dtype(x.dtype).itemsize
    o_bytes = jnp.dtype(out_dtype).itemsize
    budget = _vmem_budget_bytes()

    # bf16 weight: MXU-native and halves resident / streamed VMEM+HBM bytes.
    # (Matches PyTorch fp32 Linear to ~1e-3 at these sizes; make configurable
    # if tighter agreement is required.)
    w_bf16 = w.astype(jnp.bfloat16)
    b_f32 = b.astype(jnp.float32).reshape(1, V)
    x2 = x.reshape(N, E)

    vp128 = _round_up(V, 128)
    tile_n_fused = None if force_vocab_tiling else _fused_plan(
        N, E, vp128, x_bytes, o_bytes, budget)

    if tile_n_fused is not None:
        fused, tile_n, tile_v, Vp = True, tile_n_fused, vp128, vp128
    else:
        fused = False
        tile_n, tile_v, Vp = _tiled_plan(N, E, V, x_bytes, o_bytes, budget,
                                         max_tile_v)

    n_pad = _round_up(N, tile_n)
    if n_pad != N:
        # log-softmax is row-independent -> zero-padded rows are harmless.
        x2 = jnp.pad(x2, ((0, n_pad - N), (0, 0)))
    if Vp != V:
        # Padded vocab columns masked to a huge negative bias so they vanish
        # from max / sum-exp (zero padding there would corrupt the softmax).
        w_bf16 = jnp.pad(w_bf16, ((0, 0), (0, Vp - V)))
        b_f32 = jnp.pad(b_f32, ((0, 0), (0, Vp - V)), constant_values=_NEG_MASK)

    n_tiles = n_pad // tile_n
    passes = 1 if fused else 2
    cost = pl.CostEstimate(
        flops=int(2 * n_pad * E * Vp * passes),
        transcendentals=int(n_pad * Vp * passes),
        bytes_accessed=int(n_pad * E * x_bytes + n_pad * Vp * o_bytes
                           + E * Vp * 2 * (1 if fused else passes * n_tiles)
                           + Vp * 4),
    )

    if fused:
        cparams = pltpu.CompilerParams(
            dimension_semantics=("parallel",),          # rows shard across TCs
            vmem_limit_bytes=int(budget))
        out = pl.pallas_call(
            _proj_fused_kernel,
            out_shape=jax.ShapeDtypeStruct((n_pad, Vp), out_dtype),
            grid=(n_tiles,),
            in_specs=[
                pl.BlockSpec((tile_n, E), lambda i: (i, 0)),        # x, pipelined
                pl.BlockSpec((E, Vp), lambda i: (0, 0),
                             pipeline_mode=pl.Buffered(1)),         # resident W
                pl.BlockSpec((1, Vp), lambda i: (0, 0),
                             pipeline_mode=pl.Buffered(1)),         # resident bias
            ],
            out_specs=pl.BlockSpec((tile_n, Vp), lambda i: (i, 0)),
            compiler_params=cparams,
            cost_estimate=cost,
        )(x2, w_bf16, b_f32)
    else:
        cparams = pltpu.CompilerParams(
            dimension_semantics=("parallel", "arbitrary", "arbitrary"),
            vmem_limit_bytes=int(budget))
        out = pl.pallas_call(
            _proj_tiled_kernel,
            out_shape=jax.ShapeDtypeStruct((n_pad, Vp), out_dtype),
            grid=(n_tiles, 2, Vp // tile_v),
            in_specs=[
                pl.BlockSpec((tile_n, E), lambda n, p, v: (n, 0)),   # x row tile
                pl.BlockSpec((E, tile_v), lambda n, p, v: (0, v)),   # W vocab tile
                pl.BlockSpec((1, tile_v), lambda n, p, v: (0, v)),   # bias tile
            ],
            # Phase 0 never writes; keep its output block index pinned so no
            # uninitialized flush happens before phase 1 fills each block.
            out_specs=pl.BlockSpec((tile_n, tile_v), lambda n, p, v: (n, v * p)),
            scratch_shapes=[pltpu.VMEM((tile_n, 1), jnp.float32),    # running max
                            pltpu.VMEM((tile_n, 1), jnp.float32)],   # running sum-exp
            compiler_params=cparams,
            cost_estimate=cost,
        )(x2, w_bf16, b_f32)

    return out[:N, :V].reshape(orig_shape[:-1] + (V,))


def _reference(x, w, b):
    # Same bf16-at-the-MXU-boundary convention as the kernel.
    E = x.shape[-1]
    V = w.shape[1]
    logits = jnp.dot(x.reshape(-1, E).astype(jnp.bfloat16),
                     w.astype(jnp.bfloat16),
                     preferred_element_type=jnp.float32) + b.astype(jnp.float32)
    out = jax.nn.log_softmax(logits, axis=-1)
    return out.reshape(x.shape[:-1] + (V,)).astype(x.dtype)


if __name__ == "__main__":
    key = jax.random.PRNGKey(0)
    kx, kw, kb = jax.random.split(key, 3)

    # --- Test 1: small lane-dense vocab -> fused (weight-resident) path. ---
    B, S, E, V = 2, 8, 128, 256
    x = jax.random.normal(kx, (B, S, E), dtype=jnp.float32)
    # torch nn.Linear(E, V) stores weight as [V, E]; we keep it transposed [E, V].
    w = jax.random.normal(kw, (E, V), dtype=jnp.float32) / jnp.sqrt(E)
    b = jax.random.normal(kb, (V,), dtype=jnp.float32) * 0.01

    out = jax.block_until_ready(projection_layer(x, w, b))
    ref = _reference(x, w, b)
    assert out.shape == (B, S, V)
    assert jnp.allclose(out, ref, atol=2e-3, rtol=2e-3), \
        float(jnp.max(jnp.abs(out - ref)))
    assert jnp.allclose(jnp.sum(jnp.exp(out), axis=-1), 1.0, atol=2e-3)

    # --- Test 2: non-multiple-of-128 vocab + forced vocab tiling ->
    #     exercises the two-phase online log-softmax and the column mask. ---
    V2 = 320
    w2 = jax.random.normal(kw, (E, V2), dtype=jnp.float32) / jnp.sqrt(E)
    b2 = jax.random.normal(kb, (V2,), dtype=jnp.float32) * 0.01
    out2 = jax.block_until_ready(
        projection_layer(x, w2, b2, force_vocab_tiling=True, max_tile_v=128))
    ref2 = _reference(x, w2, b2)
    assert out2.shape == (B, S, V2)
    assert jnp.allclose(out2, ref2, atol=2e-3, rtol=2e-3), \
        float(jnp.max(jnp.abs(out2 - ref2)))
    assert jnp.allclose(jnp.sum(jnp.exp(out2), axis=-1), 1.0, atol=2e-3)

    print("KERNEL_OK")
</pallas_src>

<mosaic_0001>
module attributes {stable_mosaic.version = 11 : i64} {
  func.func @_proj_fused_kernel(%arg0: i32, %arg1: memref<16x128xf32, #tpu.memory_space<vmem>>, %arg2: memref<128x256xbf16, #tpu.memory_space<vmem>>, %arg3: memref<1x256xf32, #tpu.memory_space<vmem>>, %arg4: memref<16x256xf32, #tpu.memory_space<vmem>>) attributes {dimension_semantics = [#tpu.dimension_semantics<parallel>], iteration_bounds = array<i64: 1>, scalar_prefetch = 0 : i64, scratch_operands = 0 : i64, tpu.core_type = #tpu.core_type<tc>, window_params = [{transform_indices = @transform_0, window_bounds = array<i64: 16, 128>}, {pipeline_mode = #tpu.pipeline_mode<synchronous>, transform_indices = @transform_1, window_bounds = array<i64: 128, 256>}, {pipeline_mode = #tpu.pipeline_mode<synchronous>, transform_indices = @transform_2, window_bounds = array<i64: 1, 256>}, {transform_indices = @transform_3, window_bounds = array<i64: 16, 256>}]} {
    %c0 = arith.constant 0 : index
    %c0_0 = arith.constant 0 : index
    %0 = vector.load %arg1[%c0, %c0_0] : memref<16x128xf32, #tpu.memory_space<vmem>>, vector<16x128xf32>
    %1 = arith.truncf %0 : vector<16x128xf32> to vector<16x128xbf16>
    %c0_1 = arith.constant 0 : index
    %c0_2 = arith.constant 0 : index
    %2 = vector.load %arg2[%c0_1, %c0_2] : memref<128x256xbf16, #tpu.memory_space<vmem>>, vector<128x256xbf16>
    %cst = arith.constant dense<0.000000e+00> : vector<16x256xf32>
    %3 = tpu.matmul %1, %2, %cst {dimension_numbers = #tpu.dot_dimension_numbers<[1], [0], [0], [1], [0, 0, 1, 1], [], []>} : vector<16x128xbf16>, vector<128x256xbf16>, vector<16x256xf32> -> vector<16x256xf32>
    %c0_3 = arith.constant 0 : index
    %c0_4 = arith.constant 0 : index
    %4 = vector.load %arg3[%c0_3, %c0_4] : memref<1x256xf32, #tpu.memory_space<vmem>>, vector<1x256xf32>
    %5 = vector.broadcast %4 : vector<1x256xf32> to vector<16x256xf32>
    %6 = arith.addf %3, %5 : vector<16x256xf32>
    %cst_5 = arith.constant dense<0xFF800000> : vector<16xf32>
    %7 = vector.multi_reduction <maximumf>, %6, %cst_5 [1] : vector<16x256xf32> to vector<16xf32>
    %8 = vector.shape_cast %7 : vector<16xf32> to vector<16x1xf32>
    %9 = vector.broadcast %8 : vector<16x1xf32> to vector<16x256xf32>
    %10 = arith.subf %6, %9 : vector<16x256xf32>
    %11 = math.exp %10 : vector<16x256xf32>
    %cst_6 = arith.constant dense<0.000000e+00> : vector<16xf32>
    %12 = vector.multi_reduction <add>, %11, %cst_6 [1] : vector<16x256xf32> to vector<16xf32>
    %13 = vector.shape_cast %12 : vector<16xf32> to vector<16x1xf32>
    %14 = math.log %13 : vector<16x1xf32>
    %15 = vector.broadcast %14 : vector<16x1xf32> to vector<16x256xf32>
    %16 = arith.subf %10, %15 : vector<16x256xf32>
    %c0_7 = arith.constant 0 : index
    %c0_8 = arith.constant 0 : index
    %17 = vector.load %arg4[%c0_7, %c0_8] : memref<16x256xf32, #tpu.memory_space<vmem>>, vector<16x256xf32>
    tpu.vector_store %arg4[%c0_7, %c0_8], %16 {strides = array<i32>} : memref<16x256xf32, #tpu.memory_space<vmem>>, vector<16x256xf32>,
    return
  }
  func.func @transform_0(%arg0: i32) -> (i32, i32) {
    %c0_i32 = arith.constant 0 : i32
    %c0_i32_0 = arith.constant 0 : i32
    return %arg0, %c0_i32 : i32, i32
  }
  func.func @transform_1(%arg0: i32) -> (i32, i32) {
    %c0_i32 = arith.constant 0 : i32
    %c0_i32_0 = arith.constant 0 : i32
    %c0_i32_1 = arith.constant 0 : i32
    return %c0_i32, %c0_i32_0 : i32, i32
  }
  func.func @transform_2(%arg0: i32) -> (i32, i32) {
    %c0_i32 = arith.constant 0 : i32
    %c0_i32_0 = arith.constant 0 : i32
    %c0_i32_1 = arith.constant 0 : i32
    return %c0_i32, %c0_i32_0 : i32, i32
  }
  func.func @transform_3(%arg0: i32) -> (i32, i32) {
    %c0_i32 = arith.constant 0 : i32
    %c0_i32_0 = arith.constant 0 : i32
    return %arg0, %c0_i32 : i32, i32
  }
}

</mosaic_0001>

<llo_original>
// kernel: tpu_custom_call.1
$region0: #{tpu_custom_call.1}
  #allocation0 [shape = 'u32[]', space=smem, size = 0x4, offset = 0x4, fixed_abs, tag = 'smem constant byte address 0x4 - core index']
  #allocation1 [shape = 'u32[72,128]{1,0:T(1,128)}', space=vmem, size = 0x9000, scoped, tag = 'internal scratch']
  %s0 = inlined_call_operand.hbm [shape: f32[16,128], index: 0, kind: input, shape index: {}]
  %s1 = inlined_call_operand.hbm [shape: bf16[128,256], index: 1, kind: input, shape index: {}]
  %s2 = inlined_call_operand.hbm [shape: f32[1,256], index: 2, kind: input, shape index: {}]
  %s3 = inlined_call_operand.hbm [shape: f32[16,256], index: 3, kind: output, shape index: {}]
  %s4 = sld [smem:[#allocation0]]
  $region34: #{tpu_custom_call.1} parent=0
    _
  %s6 = ssub.s32 1, %s4
  %s7 = scalar_select 0, %s6, %s4
  $region1: #{tpu_custom_call.1} parent=0
    #allocation2 [shape = 'u8[8192]{0}', space=vmem, size = 0x2000, scoped, tag = 'input window, operand 0, single buffered']
    #allocation3 [shape = 's32[1]{0}', space=sflag, size = 0x4, scoped, tag = 'scoped memory for tpu_custom_call.1']
    #allocation4 [shape = 's32[1]{0}', space=sflag, size = 0x4, scoped, tag = 'scoped memory for tpu_custom_call.1']
    #allocation5 [shape = 'u8[65536]{0}', space=vmem, size = 0x10000, scoped, tag = 'input window, operand 1, single buffered']
    #allocation6 [shape = 's32[1]{0}', space=sflag, size = 0x4, scoped, tag = 'scoped memory for tpu_custom_call.1']
    #allocation7 [shape = 'u8[1024]{0}', space=vmem, size = 0x400, scoped, tag = 'input window, operand 2, single buffered']
    #allocation8 [shape = 'u8[16384]{0}', space=vmem, size = 0x4000, scoped, tag = 'output window, operand 0, single buffered']
    %8 = vsyncpa [#allocation3], 0
    %9 = vsyncpa [#allocation6], 0
    %10 = vsyncpa [#allocation4], 0
    // Predicated region
    $region2: #{tpu_custom_call.1} parent=1 // pred_check
      _
    $region3: #{tpu_custom_call.1} parent=1 // pred_check_branch
      %12 = sbr.rel (0) target = $region5
    $region4: #{tpu_custom_call.1} parent=1 // pred_region
      %14 = vsyncadd [#allocation3], 0
      %s15 = sshll.u32 %s0, 4
      %s16 = int_to_ptr.hbm [resolvable:$true] %s15
      %s17 = sshll.u32 [#allocation2], 4
      %s18 = int_to_ptr.vmem [resolvable:$true] %s17
      %23 = dma.hbm_to_vmem [thread:$0]  %s16, 256, %s18, [#allocation3], 128, 128, 8
    $region5: #{tpu_custom_call.1} parent=1 // pred_fallthru
      _
    // Predicated region
    $region6: #{tpu_custom_call.1} parent=1 // pred_check
      _
    $region7: #{tpu_custom_call.1} parent=1 // pred_check_branch
      %25 = sbr.rel (0) target = $region9
    $region8: #{tpu_custom_call.1} parent=1 // pred_region
      %27 = vsyncadd [#allocation6], 0
      %s28 = sshll.u32 %s1, 4
      %s29 = int_to_ptr.hbm [resolvable:$true] %s28
      %s30 = sshll.u32 [#allocation5], 4
      %s31 = int_to_ptr.vmem [resolvable:$true] %s30
      %36 = dma.hbm_to_vmem [thread:$0]  %s29, 2048, %s31, [#allocation6], 128, 128, 8
    $region9: #{tpu_custom_call.1} parent=1 // pred_fallthru
      _
    // Predicated region
    $region10: #{tpu_custom_call.1} parent=1 // pred_check
      _
    $region11: #{tpu_custom_call.1} parent=1 // pred_check_branch
      %38 = sbr.rel (0) target = $region13
    $region12: #{tpu_custom_call.1} parent=1 // pred_region
      %40 = vsyncadd [#allocation6], 0
      %s42 = sshll.u32 %s2, 4
      %s43 = int_to_ptr.hbm [resolvable:$true] %s42
      %s44 = sshll.u32 [#allocation7], 4
      %s45 = int_to_ptr.vmem [resolvable:$true] %s44
      %47 = dma.hbm_to_vmem [thread:$0]  %s43, 32, %s45, [#allocation6]
    $region13: #{tpu_custom_call.1} parent=1 // pred_fallthru
      _
    // Predicated region
    $region14: #{tpu_custom_call.1} parent=1 // pred_check
      _
    $region15: #{tpu_custom_call.1} parent=1 // pred_check_branch
      %49 = sbr.rel (0) target = $region17
    $region16: #{tpu_custom_call.1} parent=1 // pred_region
      %51 = dma.done [#allocation3], 256
    $region17: #{tpu_custom_call.1} parent=1 // pred_fallthru
      _
    // Predicated region
    $region18: #{tpu_custom_call.1} parent=1 // pred_check
      _
    $region19: #{tpu_custom_call.1} parent=1 // pred_check_branch
      %53 = sbr.rel (0) target = $region21
    $region20: #{tpu_custom_call.1} parent=1 // pred_region
      %55 = dma.done [#allocation6], 2048
    $region21: #{tpu_custom_call.1} parent=1 // pred_fallthru
      _
    // Predicated region
    $region22: #{tpu_custom_call.1} parent=1 // pred_check
      _
    $region23: #{tpu_custom_call.1} parent=1 // pred_check_branch
      %57 = sbr.rel (0) target = $region25
    $region24: #{tpu_custom_call.1} parent=1 // pred_region
      %59 = dma.done [#allocation6], 32
    $region25: #{tpu_custom_call.1} parent=1 // pred_fallthru
      _
    %v60 = vld [vmem:[#allocation2] sm:$0xff]
    %v61 = vld [vmem:[#allocation2 + $0x8] sm:$0xff]
    %v62 = vpack.c.bf16 %v61, %v60
    %v63 = vld [vmem:[#allocation5] sm:$0xff]
    %v64 = vld [vmem:[#allocation5 + $0x8] sm:$0xff]
    %v65 = vld [vmem:[#allocation5 + $0x10] sm:$0xff]
    %v66 = vld [vmem:[#allocation5 + $0x18] sm:$0xff]
    %v67 = vld [vmem:[#allocation5 + $0x20] sm:$0xff]
    %v68 = vld [vmem:[#allocation5 + $0x28] sm:$0xff]
    %v69 = vld [vmem:[#allocation5 + $0x30] sm:$0xff]
    %v70 = vld [vmem:[#allocation5 + $0x38] sm:$0xff]
    %v71 = vld [vmem:[#allocation5 + $0x40] sm:$0xff]
    %v72 = vld [vmem:[#allocation5 + $0x48] sm:$0xff]
    %v73 = vld [vmem:[#allocation5 + $0x50] sm:$0xff]
    %v74 = vld [vmem:[#allocation5 + $0x58] sm:$0xff]
    %v75 = vld [vmem:[#allocation5 + $0x60] sm:$0xff]
    %v76 = vld [vmem:[#allocation5 + $0x68] sm:$0xff]
    %v77 = vld [vmem:[#allocation5 + $0x70] sm:$0xff]
    %v78 = vld [vmem:[#allocation5 + $0x78] sm:$0xff]
    %v79 = vld [vmem:[#allocation7] sm:$0x3]
    %v81 = vperm.slane %v79, 0
    %v82 = vperm.slane %v79, 1
    %v101 = vunpack.c.l.b16 %v63
    %v102 = vunpack.c.h.b16 %v63
    %v103 = vunpack.c.l.b16 %v64
    %v104 = vunpack.c.h.b16 %v64
    %v105 = vunpack.c.l.b16 %v65
    %v106 = vunpack.c.h.b16 %v65
    %v107 = vunpack.c.l.b16 %v66
    %v108 = vunpack.c.h.b16 %v66
    %v109 = vunpack.c.l.b16 %v67
    %v110 = vunpack.c.h.b16 %v67
    %v111 = vunpack.c.l.b16 %v68
    %v112 = vunpack.c.h.b16 %v68
    %v113 = vunpack.c.l.b16 %v69
    %v114 = vunpack.c.h.b16 %v69
    %v115 = vunpack.c.l.b16 %v70
    %v116 = vunpack.c.h.b16 %v70
    %v117 = vunpack.c.l.b16 %v71
    %v118 = vunpack.c.h.b16 %v71
    %v119 = vunpack.c.l.b16 %v72
    %v120 = vunpack.c.h.b16 %v72
    %v121 = vunpack.c.l.b16 %v73
    %v122 = vunpack.c.h.b16 %v73
    %v123 = vunpack.c.l.b16 %v74
    %v124 = vunpack.c.h.b16 %v74
    %v125 = vunpack.c.l.b16 %v75
    %v126 = vunpack.c.h.b16 %v75
    %v127 = vunpack.c.l.b16 %v76
    %v128 = vunpack.c.h.b16 %v76
    %v129 = vunpack.c.l.b16 %v77
    %v130 = vunpack.c.h.b16 %v77
    %v131 = vunpack.c.l.b16 %v78
    %v132 = vunpack.c.h.b16 %v78
    %v133 = vpack.c.b16 %v103, %v101
    %v134 = vpack.c.b16 %v104, %v102
    %v135 = vpack.c.b16 %v107, %v105
    %v136 = vpack.c.b16 %v108, %v106
    %v137 = vpack.c.b16 %v111, %v109
    %v138 = vpack.c.b16 %v112, %v110
    %v139 = vpack.c.b16 %v115, %v113
    %v140 = vpack.c.b16 %v116, %v114
    %v141 = vpack.c.b16 %v119, %v117
    %v142 = vpack.c.b16 %v120, %v118
    %v143 = vpack.c.b16 %v123, %v121
    %v144 = vpack.c.b16 %v124, %v122
    %v145 = vpack.c.b16 %v127, %v125
    %v146 = vpack.c.b16 %v128, %v126
    %v147 = vpack.c.b16 %v131, %v129
    %v148 = vpack.c.b16 %v132, %v130
    %165 = vmatpush.bf16.msra.mxu0 %v147
    %166 = vmatpush.bf16.msra.mxu0 %v145
    %167 = vmatpush.bf16.msra.mxu0 %v143
    %168 = vmatpush.bf16.msra.mxu0 %v141
    %169 = vmatpush.bf16.msra.mxu0 %v139
    %170 = vmatpush.bf16.msra.mxu0 %v137
    %171 = vmatpush.bf16.msra.mxu0 %v135
    %172 = vmatpush.bf16.msra.mxu0 %v133
    %173 = vmatmul.bf16.gmra.mxu0 %v62
    %v174 = vpop.f32.mrf.mxu0
    %v175 = vadd.f32 %v81, %v174
    %v176 = vpop.f32.mrf.mxu0
    %v177 = vadd.f32 %v81, %v176
    %178 = vdwg.mxu0
    %179 = vmatpush.bf16.msra.mxu0 %v148
    %180 = vmatpush.bf16.msra.mxu0 %v146
    %181 = vmatpush.bf16.msra.mxu0 %v144
    %182 = vmatpush.bf16.msra.mxu0 %v142
    %183 = vmatpush.bf16.msra.mxu0 %v140
    %184 = vmatpush.bf16.msra.mxu0 %v138
    %185 = vmatpush.bf16.msra.mxu0 %v136
    %186 = vmatpush.bf16.msra.mxu0 %v134
    %187 = vmatmul.bf16.gmra.mxu0 %v62
    %v188 = vpop.f32.mrf.mxu0
    %v189 = vadd.f32 %v82, %v188
    %v190 = vpop.f32.mrf.mxu0
    %v191 = vadd.f32 %v82, %v190
    %192 = vdwg.mxu0
    %v193 = vmax.f32 %v175, %v189
    %194 = vmax.xlane.f32.xlu0 %v193
    %v195 = vpop.xlane.xlu0 %194
    %v196 = vmax.f32 %v177, %v191
    %197 = vmax.xlane.f32.xlu0 %v196
    %v198 = vpop.xlane.xlu0 %197
    %v199 = vsub.f32 %v175, %v195
    %v200 = vsub.f32 %v189, %v195
    %v201 = vsub.f32 %v177, %v198
    %v202 = vsub.f32 %v191, %v198
    %v203 = vmul.f32 %v199, 1.442695
    %v204 = vpow.pop %v203
    %v205 = vmul.f32 %v200, 1.442695
    %v206 = vpow.pop %v205
    %v207 = vmul.f32 %v201, 1.442695
    %v208 = vpow.pop %v207
    %v209 = vmul.f32 %v202, 1.442695
    %v210 = vpow.pop %v209
    %v211 = vadd.f32 %v204, %v206
    %212 = vadd.xlane.f32.xlu0 %v211
    %v213 = vpop.xlane.xlu0 %212
    %v214 = vadd.f32 %v208, %v210
    %215 = vadd.xlane.f32.xlu0 %v214
    %v216 = vpop.xlane.xlu0 %215
    %v217 = vlog2.pop %v213
    %v218 = vmul.f32 %v217, 0.6931472
    %v219 = vlog2.pop %v216
    %v220 = vmul.f32 %v219, 0.6931472
    %v221 = vsub.f32 %v199, %v218
    %v222 = vsub.f32 %v200, %v218
    %v223 = vsub.f32 %v201, %v220
    %v224 = vsub.f32 %v202, %v220
    %225 = vst [vmem:[#allocation8] sm:$0xff] %v221
    %226 = vst [vmem:[#allocation8 + $0x8] sm:$0xff] %v222
    %227 = vst [vmem:[#allocation8 + $0x10] sm:$0xff] %v223
    %228 = vst [vmem:[#allocation8 + $0x18] sm:$0xff] %v224
    // Predicated region
    $region26: #{tpu_custom_call.1} parent=1 // pred_check
      _
    $region27: #{tpu_custom_call.1} parent=1 // pred_check_branch
      %230 = sbr.rel (0) target = $region29
    $region28: #{tpu_custom_call.1} parent=1 // pred_region
      %232 = vsyncadd [#allocation4], 0
      %s233 = sshll.u32 [#allocation8], 4
      %s234 = int_to_ptr.vmem [resolvable:$true] %s233
      %s235 = sshll.u32 %s3, 4
      %s236 = int_to_ptr.hbm [resolvable:$true] %s235
      %241 = dma.vmem_to_hbm [thread:$0]  %s234, 512, %s236, [#allocation4], 256, 256, 16
    $region29: #{tpu_custom_call.1} parent=1 // pred_fallthru
      _
    // Predicated region
    $region30: #{tpu_custom_call.1} parent=1 // pred_check
      _
    $region31: #{tpu_custom_call.1} parent=1 // pred_check_branch
      %243 = sbr.rel (0) target = $region33
    $region32: #{tpu_custom_call.1} parent=1 // pred_region
      %245 = dma.done [#allocation4], 512
    $region33: #{tpu_custom_call.1} parent=1 // pred_fallthru
      _
    %246 = vsyncpa [#allocation3], 1
    %247 = vsyncpa [#allocation6], 1
    %248 = vsyncpa [#allocation4], 1

</llo_original>
